<compile_context>
chip_gen: v6e
topology: v6e:2x2x1
jax: 0.10.0
libtpu: 0.0.40
codegen_flags: <defaults>
</compile_context>

<pallas_src>
import math
import functools

import jax
import jax.numpy as jnp
from jax import lax
from jax.experimental import pallas as pl
from jax.experimental.pallas import tpu as pltpu


def _round_up(x, m):
    return (x + m - 1) // m * m


def _cdiv(a, b):
    return (a + b - 1) // b


def _residual_ff_kernel(x_ref, ln_g_ref, ln_b_ref, w1_ref, b1_ref,
                        w2_ref, b2_ref, o_ref):
    """out = x + (GELU(LN(x) @ W1 + b1) @ W2 + b2) for one row tile."""
    x = x_ref[...].astype(jnp.float32)                     # (TM, D)

    # LayerNorm over the (unpadded) feature axis; eps matches torch's 1e-5.
    mu = jnp.mean(x, axis=-1, keepdims=True)
    xc = x - mu
    var = jnp.mean(xc * xc, axis=-1, keepdims=True)
    h = xc * lax.rsqrt(var + 1e-5) * ln_g_ref[...] + ln_b_ref[...]

    # Linear D -> Hp on the MXU (bf16 operands, f32 accumulation).
    h1 = jnp.dot(h.astype(jnp.bfloat16), w1_ref[...],
                 preferred_element_type=jnp.float32)
    h1 = h1 + b1_ref[...]                                  # (TM, Hp)

    # Exact GELU (erf form) to match torch.nn.GELU's default.
    h1 = 0.5 * h1 * (1.0 + lax.erf(h1 * (1.0 / math.sqrt(2.0))))

    # Linear Hp -> D on the MXU.
    h2 = jnp.dot(h1.astype(jnp.bfloat16), w2_ref[...],
                 preferred_element_type=jnp.float32)
    h2 = h2 + b2_ref[...]                                  # (TM, D)

    # Residual add: re-read x from the already-resident VMEM input buffer.
    o_ref[...] = (h2 + x_ref[...].astype(jnp.float32)).astype(o_ref.dtype)


def prepare_ff_params(ln_g, ln_b, w1, b1, w2, b2):
    """Pad the hidden axis to a multiple of 128 and cast weights to bf16.

    Call once at model init so the constant pad/cast XLA ops are hoisted out
    of every forward pass.  Padded lanes/rows are zero, so results match.
    """
    D, H = w1.shape
    Hp = _round_up(H, 128)
    f32 = jnp.float32
    return {
        "ln_g": ln_g.astype(f32).reshape(1, D),
        "ln_b": ln_b.astype(f32).reshape(1, D),
        "w1": jnp.pad(w1.astype(f32), ((0, 0), (0, Hp - H))).astype(jnp.bfloat16),
        "b1": jnp.pad(b1.astype(f32), (0, Hp - H)).reshape(1, Hp),
        "w2": jnp.pad(w2.astype(f32), ((0, Hp - H), (0, 0))).astype(jnp.bfloat16),
        "b2": b2.astype(f32).reshape(1, D),
    }


def residual_add_ff(x, params, *, tile_m=2048):
    """x: (B, S, D) -> (B, S, D) using padded/cast params from prepare_ff_params."""
    B, S, D = x.shape
    Hp = params["w1"].shape[1]
    M = B * S

    # Balanced row tiles (no mostly-padding last tile).  Force >= 2 grid steps
    # when M is large enough so the "parallel" axis can use both v7x
    # TensorCores and the I/O pipeline stays double-buffered.
    num_tiles = _cdiv(M, tile_m)
    if num_tiles == 1 and M >= 512:
        num_tiles = 2
    tile_m_eff = _round_up(_cdiv(M, num_tiles), 8)
    Mp = tile_m_eff * num_tiles

    x2 = x.reshape(M, D)
    if Mp != M:
        x2 = jnp.pad(x2, ((0, Mp - M), (0, 0)))   # tiny: < 8 * num_tiles rows

    out2 = pl.pallas_call(
        _residual_ff_kernel,
        out_shape=jax.ShapeDtypeStruct((Mp, D), x.dtype),
        grid_spec=pltpu.PrefetchScalarGridSpec(
            num_scalar_prefetch=0,
            grid=(num_tiles,),
            in_specs=[
                pl.BlockSpec((tile_m_eff, D), lambda i: (i, 0)),   # x rows
                pl.BlockSpec((1, D), lambda i: (0, 0)),            # ln gamma
                pl.BlockSpec((1, D), lambda i: (0, 0)),            # ln beta
                pl.BlockSpec((D, Hp), lambda i: (0, 0)),           # W1 (bf16)
                pl.BlockSpec((1, Hp), lambda i: (0, 0)),           # b1
                pl.BlockSpec((Hp, D), lambda i: (0, 0)),           # W2 (bf16)
                pl.BlockSpec((1, D), lambda i: (0, 0)),            # b2
            ],
            out_specs=pl.BlockSpec((tile_m_eff, D), lambda i: (i, 0)),
        ),
        compiler_params=pltpu.CompilerParams(
            dimension_semantics=("parallel",),
            vmem_limit_bytes=24 << 20),
    )(x2, params["ln_g"], params["ln_b"], params["w1"], params["b1"],
      params["w2"], params["b2"])

    if Mp != M:
        out2 = out2[:M]
    return out2.reshape(B, S, D)


def _reference(x, ln_g, ln_b, w1, b1, w2, b2):
    """Pure-JAX reference matching the kernel's precision policy
    (f32 LN/GELU/residual, bf16 matmul operands with f32 accumulation)."""
    xf = x.astype(jnp.float32)
    mu = jnp.mean(xf, axis=-1, keepdims=True)
    var = jnp.mean((xf - mu) ** 2, axis=-1, keepdims=True)
    h = (xf - mu) * lax.rsqrt(var + 1e-5) * ln_g + ln_b
    h1 = jnp.dot(h.astype(jnp.bfloat16), w1.astype(jnp.bfloat16),
                 preferred_element_type=jnp.float32) + b1
    h1 = 0.5 * h1 * (1.0 + lax.erf(h1 / math.sqrt(2.0)))
    h2 = jnp.dot(h1.astype(jnp.bfloat16), w2.astype(jnp.bfloat16),
                 preferred_element_type=jnp.float32) + b2
    return (h2 + xf).astype(x.dtype)


if __name__ == "__main__":
    key = jax.random.PRNGKey(0)
    B, S, D = 2, 8, 40          # emb_size=40 as in the Conformer spec
    H = 4 * D                   # forward_expansion = 4

    kx, kg, kb, kw1, kb1, kw2, kb2 = jax.random.split(key, 7)
    x = jax.random.normal(kx, (B, S, D), dtype=jnp.float32)

    # Deterministic synthetic parameters (shapes per the module's fn).
    ln_g = 1.0 + 0.01 * jax.random.normal(kg, (D,), dtype=jnp.float32)
    ln_b = 0.01 * jax.random.normal(kb, (D,), dtype=jnp.float32)
    w1 = jax.random.normal(kw1, (D, H), dtype=jnp.float32) / math.sqrt(D)
    b1 = 0.01 * jax.random.normal(kb1, (H,), dtype=jnp.float32)
    w2 = jax.random.normal(kw2, (H, D), dtype=jnp.float32) / math.sqrt(H)
    b2 = 0.01 * jax.random.normal(kb2, (D,), dtype=jnp.float32)

    # Parameter padding/casting hoisted out of the forward pass ("model init").
    params = prepare_ff_params(ln_g, ln_b, w1, b1, w2, b2)
    fwd = jax.jit(functools.partial(residual_add_ff, tile_m=2048))

    out = jax.block_until_ready(fwd(x, params))

    ref = _reference(x, ln_g, ln_b, w1, b1, w2, b2)
    assert out.shape == x.shape and out.dtype == x.dtype
    err = float(jnp.max(jnp.abs(out - ref)))
    assert jnp.allclose(out, ref, atol=2e-3, rtol=2e-3), (
        f"mismatch vs reference: max abs err = {err}")

    print("KERNEL_OK")
</pallas_src>

<mosaic_0001>
module attributes {stable_mosaic.version = 11 : i64} {
  func.func @_residual_ff_kernel(%arg0: i32, %arg1: memref<16x40xf32, #tpu.memory_space<vmem>>, %arg2: memref<1x40xf32, #tpu.memory_space<vmem>>, %arg3: memref<1x40xf32, #tpu.memory_space<vmem>>, %arg4: memref<40x256xbf16, #tpu.memory_space<vmem>>, %arg5: memref<1x256xf32, #tpu.memory_space<vmem>>, %arg6: memref<256x40xbf16, #tpu.memory_space<vmem>>, %arg7: memref<1x40xf32, #tpu.memory_space<vmem>>, %arg8: memref<16x40xf32, #tpu.memory_space<vmem>>) attributes {dimension_semantics = [#tpu.dimension_semantics<parallel>], iteration_bounds = array<i64: 1>, scalar_prefetch = 0 : i64, scratch_operands = 0 : i64, tpu.core_type = #tpu.core_type<tc>, window_params = [{transform_indices = @transform_0, window_bounds = array<i64: 16, 40>}, {pipeline_mode = #tpu.pipeline_mode<synchronous>, transform_indices = @transform_1, window_bounds = array<i64: 1, 40>}, {pipeline_mode = #tpu.pipeline_mode<synchronous>, transform_indices = @transform_2, window_bounds = array<i64: 1, 40>}, {pipeline_mode = #tpu.pipeline_mode<synchronous>, transform_indices = @transform_3, window_bounds = array<i64: 40, 256>}, {pipeline_mode = #tpu.pipeline_mode<synchronous>, transform_indices = @transform_4, window_bounds = array<i64: 1, 256>}, {pipeline_mode = #tpu.pipeline_mode<synchronous>, transform_indices = @transform_5, window_bounds = array<i64: 256, 40>}, {pipeline_mode = #tpu.pipeline_mode<synchronous>, transform_indices = @transform_6, window_bounds = array<i64: 1, 40>}, {transform_indices = @transform_7, window_bounds = array<i64: 16, 40>}]} {
    %c0 = arith.constant 0 : index
    %c0_0 = arith.constant 0 : index
    %0 = vector.load %arg1[%c0, %c0_0] : memref<16x40xf32, #tpu.memory_space<vmem>>, vector<16x40xf32>
    %cst = arith.constant dense<0.000000e+00> : vector<16xf32>
    %1 = vector.multi_reduction <add>, %0, %cst [1] : vector<16x40xf32> to vector<16xf32>
    %2 = vector.shape_cast %1 : vector<16xf32> to vector<16x1xf32>
    %cst_1 = arith.constant 4.000000e+01 : f32
    %3 = vector.broadcast %cst_1 : f32 to vector<16x1xf32>
    %4 = arith.divf %2, %3 : vector<16x1xf32>
    %5 = vector.broadcast %4 : vector<16x1xf32> to vector<16x40xf32>
    %6 = arith.subf %0, %5 : vector<16x40xf32>
    %7 = arith.mulf %6, %6 : vector<16x40xf32>
    %cst_2 = arith.constant dense<0.000000e+00> : vector<16xf32>
    %8 = vector.multi_reduction <add>, %7, %cst_2 [1] : vector<16x40xf32> to vector<16xf32>
    %9 = vector.shape_cast %8 : vector<16xf32> to vector<16x1xf32>
    %cst_3 = arith.constant 4.000000e+01 : f32
    %10 = vector.broadcast %cst_3 : f32 to vector<16x1xf32>
    %11 = arith.divf %9, %10 : vector<16x1xf32>
    %cst_4 = arith.constant 9.99999974E-6 : f32
    %12 = vector.broadcast %cst_4 : f32 to vector<16x1xf32>
    %13 = arith.addf %11, %12 : vector<16x1xf32>
    %14 = math.rsqrt %13 : vector<16x1xf32>
    %15 = vector.broadcast %14 : vector<16x1xf32> to vector<16x40xf32>
    %16 = arith.mulf %6, %15 : vector<16x40xf32>
    %c0_5 = arith.constant 0 : index
    %c0_6 = arith.constant 0 : index
    %17 = vector.load %arg2[%c0_5, %c0_6] : memref<1x40xf32, #tpu.memory_space<vmem>>, vector<1x40xf32>
    %18 = vector.broadcast %17 : vector<1x40xf32> to vector<16x40xf32>
    %19 = arith.mulf %16, %18 : vector<16x40xf32>
    %c0_7 = arith.constant 0 : index
    %c0_8 = arith.constant 0 : index
    %20 = vector.load %arg3[%c0_7, %c0_8] : memref<1x40xf32, #tpu.memory_space<vmem>>, vector<1x40xf32>
    %21 = vector.broadcast %20 : vector<1x40xf32> to vector<16x40xf32>
    %22 = arith.addf %19, %21 : vector<16x40xf32>
    %23 = arith.truncf %22 : vector<16x40xf32> to vector<16x40xbf16>
    %c0_9 = arith.constant 0 : index
    %c0_10 = arith.constant 0 : index
    %24 = vector.load %arg4[%c0_9, %c0_10] : memref<40x256xbf16, #tpu.memory_space<vmem>>, vector<40x256xbf16>
    %cst_11 = arith.constant dense<0.000000e+00> : vector<16x256xf32>
    %25 = tpu.matmul %23, %24, %cst_11 {dimension_numbers = #tpu.dot_dimension_numbers<[1], [0], [0], [1], [0, 0, 1, 1], [], []>} : vector<16x40xbf16>, vector<40x256xbf16>, vector<16x256xf32> -> vector<16x256xf32>
    %c0_12 = arith.constant 0 : index
    %c0_13 = arith.constant 0 : index
    %26 = vector.load %arg5[%c0_12, %c0_13] : memref<1x256xf32, #tpu.memory_space<vmem>>, vector<1x256xf32>
    %27 = vector.broadcast %26 : vector<1x256xf32> to vector<16x256xf32>
    %28 = arith.addf %25, %27 : vector<16x256xf32>
    %cst_14 = arith.constant 5.000000e-01 : f32
    %29 = vector.broadcast %cst_14 : f32 to vector<16x256xf32>
    %30 = arith.mulf %29, %28 : vector<16x256xf32>
    %cst_15 = arith.constant 0.707106769 : f32
    %31 = vector.broadcast %cst_15 : f32 to vector<16x256xf32>
    %32 = arith.mulf %28, %31 : vector<16x256xf32>
    %33 = math.erf %32 : vector<16x256xf32>
    %cst_16 = arith.constant 1.000000e+00 : f32
    %34 = vector.broadcast %cst_16 : f32 to vector<16x256xf32>
    %35 = arith.addf %34, %33 : vector<16x256xf32>
    %36 = arith.mulf %30, %35 : vector<16x256xf32>
    %37 = arith.truncf %36 : vector<16x256xf32> to vector<16x256xbf16>
    %c0_17 = arith.constant 0 : index
    %c0_18 = arith.constant 0 : index
    %38 = vector.load %arg6[%c0_17, %c0_18] : memref<256x40xbf16, #tpu.memory_space<vmem>>, vector<256x40xbf16>
    %cst_19 = arith.constant dense<0.000000e+00> : vector<16x40xf32>
    %39 = tpu.matmul %37, %38, %cst_19 {dimension_numbers = #tpu.dot_dimension_numbers<[1], [0], [0], [1], [0, 0, 1, 1], [], []>} : vector<16x256xbf16>, vector<256x40xbf16>, vector<16x40xf32> -> vector<16x40xf32>
    %c0_20 = arith.constant 0 : index
    %c0_21 = arith.constant 0 : index
    %40 = vector.load %arg7[%c0_20, %c0_21] : memref<1x40xf32, #tpu.memory_space<vmem>>, vector<1x40xf32>
    %41 = vector.broadcast %40 : vector<1x40xf32> to vector<16x40xf32>
    %42 = arith.addf %39, %41 : vector<16x40xf32>
    %c0_22 = arith.constant 0 : index
    %c0_23 = arith.constant 0 : index
    %43 = vector.load %arg1[%c0_22, %c0_23] : memref<16x40xf32, #tpu.memory_space<vmem>>, vector<16x40xf32>
    %44 = arith.addf %42, %43 : vector<16x40xf32>
    %c0_24 = arith.constant 0 : index
    %c0_25 = arith.constant 0 : index
    %45 = vector.load %arg8[%c0_24, %c0_25] : memref<16x40xf32, #tpu.memory_space<vmem>>, vector<16x40xf32>
    tpu.vector_store %arg8[%c0_24, %c0_25], %44 {strides = array<i32>} : memref<16x40xf32, #tpu.memory_space<vmem>>, vector<16x40xf32>,
    return
  }
  func.func @transform_0(%arg0: i32) -> (i32, i32) {
    %c0_i32 = arith.constant 0 : i32
    %c0_i32_0 = arith.constant 0 : i32
    return %arg0, %c0_i32 : i32, i32
  }
  func.func @transform_1(%arg0: i32) -> (i32, i32) {
    %c0_i32 = arith.constant 0 : i32
    %c0_i32_0 = arith.constant 0 : i32
    %c0_i32_1 = arith.constant 0 : i32
    return %c0_i32, %c0_i32_0 : i32, i32
  }
  func.func @transform_2(%arg0: i32) -> (i32, i32) {
    %c0_i32 = arith.constant 0 : i32
    %c0_i32_0 = arith.constant 0 : i32
    %c0_i32_1 = arith.constant 0 : i32
    return %c0_i32, %c0_i32_0 : i32, i32
  }
  func.func @transform_3(%arg0: i32) -> (i32, i32) {
    %c0_i32 = arith.constant 0 : i32
    %c0_i32_0 = arith.constant 0 : i32
    %c0_i32_1 = arith.constant 0 : i32
    return %c0_i32, %c0_i32_0 : i32, i32
  }
  func.func @transform_4(%arg0: i32) -> (i32, i32) {
    %c0_i32 = arith.constant 0 : i32
    %c0_i32_0 = arith.constant 0 : i32
    %c0_i32_1 = arith.constant 0 : i32
    return %c0_i32, %c0_i32_0 : i32, i32
  }
  func.func @transform_5(%arg0: i32) -> (i32, i32) {
    %c0_i32 = arith.constant 0 : i32
    %c0_i32_0 = arith.constant 0 : i32
    %c0_i32_1 = arith.constant 0 : i32
    return %c0_i32, %c0_i32_0 : i32, i32
  }
  func.func @transform_6(%arg0: i32) -> (i32, i32) {
    %c0_i32 = arith.constant 0 : i32
    %c0_i32_0 = arith.constant 0 : i32
    %c0_i32_1 = arith.constant 0 : i32
    return %c0_i32, %c0_i32_0 : i32, i32
  }
  func.func @transform_7(%arg0: i32) -> (i32, i32) {
    %c0_i32 = arith.constant 0 : i32
    %c0_i32_0 = arith.constant 0 : i32
    return %arg0, %c0_i32 : i32, i32
  }
}

</mosaic_0001>

<llo_original>
// kernel: residual_add_ff.1
$region0: #{residual_add_ff.1}
  #allocation0 [shape = 'u32[]', space=smem, size = 0x4, offset = 0x4, fixed_abs, tag = 'smem constant byte address 0x4 - core index']
  #allocation1 [shape = 'u32[144,128]{1,0:T(1,128)}', space=vmem, size = 0x12000, scoped, tag = 'internal scratch']
  %s0 = inlined_call_operand.vmem [shape: f32[16,40], index: 0, kind: input, shape index: {}]
  %s1 = inlined_call_operand.vmem [shape: f32[1,40], index: 1, kind: input, shape index: {}]
  %s2 = inlined_call_operand.vmem [shape: f32[1,40], index: 2, kind: input, shape index: {}]
  %s3 = inlined_call_operand.vmem [shape: bf16[40,256], index: 3, kind: input, shape index: {}]
  %s4 = inlined_call_operand.vmem [shape: f32[1,256], index: 4, kind: input, shape index: {}]
  %s5 = inlined_call_operand.vmem [shape: bf16[256,40], index: 5, kind: input, shape index: {}]
  %s6 = inlined_call_operand.vmem [shape: f32[1,40], index: 6, kind: input, shape index: {}]
  %s7 = inlined_call_operand.hbm [shape: f32[16,40], index: 7, kind: output, shape index: {}]
  %s8 = sld [smem:[#allocation0]]
  $region38: #{residual_add_ff.1} parent=0
    _
  %s10 = ssub.s32 1, %s8
  %s11 = scalar_select 0, %s10, %s8
  $region1: #{residual_add_ff.1} parent=0
    #allocation2 [shape = 'u8[8192]{0}', space=vmem, size = 0x2000, scoped, tag = 'output window, operand 0, single buffered']
    #allocation3 [shape = 's32[1]{0}', space=sflag, size = 0x4, scoped, tag = 'scoped memory for residual_add_ff.1']
    %12 = vsyncpa [#allocation3], 0
    // Predicated region
    $region2: #{residual_add_ff.1} parent=1 // pred_check
      _
    $region3: #{residual_add_ff.1} parent=1 // pred_check_branch
      %14 = sbr.rel (0) target = $region5
    $region4: #{residual_add_ff.1} parent=1 // pred_region
      _
    $region5: #{residual_add_ff.1} parent=1 // pred_fallthru
      _
    // Predicated region
    $region6: #{residual_add_ff.1} parent=1 // pred_check
      _
    $region7: #{residual_add_ff.1} parent=1 // pred_check_branch
      %16 = sbr.rel (0) target = $region9
    $region8: #{residual_add_ff.1} parent=1 // pred_region
      _
    $region9: #{residual_add_ff.1} parent=1 // pred_fallthru
      _
    // Predicated region
    $region10: #{residual_add_ff.1} parent=1 // pred_check
      _
    $region11: #{residual_add_ff.1} parent=1 // pred_check_branch
      %18 = sbr.rel (0) target = $region13
    $region12: #{residual_add_ff.1} parent=1 // pred_region
      _
    $region13: #{residual_add_ff.1} parent=1 // pred_fallthru
      _
    // Predicated region
    $region14: #{residual_add_ff.1} parent=1 // pred_check
      _
    $region15: #{residual_add_ff.1} parent=1 // pred_check_branch
      %20 = sbr.rel (0) target = $region17
    $region16: #{residual_add_ff.1} parent=1 // pred_region
      _
    $region17: #{residual_add_ff.1} parent=1 // pred_fallthru
      _
    // Predicated region
    $region18: #{residual_add_ff.1} parent=1 // pred_check
      _
    $region19: #{residual_add_ff.1} parent=1 // pred_check_branch
      %22 = sbr.rel (0) target = $region21
    $region20: #{residual_add_ff.1} parent=1 // pred_region
      _
    $region21: #{residual_add_ff.1} parent=1 // pred_fallthru
      _
    // Predicated region
    $region22: #{residual_add_ff.1} parent=1 // pred_check
      _
    $region23: #{residual_add_ff.1} parent=1 // pred_check_branch
      %24 = sbr.rel (0) target = $region25
    $region24: #{residual_add_ff.1} parent=1 // pred_region
      _
    $region25: #{residual_add_ff.1} parent=1 // pred_fallthru
      _
    // Predicated region
    $region26: #{residual_add_ff.1} parent=1 // pred_check
      _
    $region27: #{residual_add_ff.1} parent=1 // pred_check_branch
      %26 = sbr.rel (0) target = $region29
    $region28: #{residual_add_ff.1} parent=1 // pred_region
      _
    $region29: #{residual_add_ff.1} parent=1 // pred_fallthru
      _
    %v28 = vld [vmem:[%s0] sm:$0xff]
    %v29 = vld [vmem:[%s0 + $0x8] sm:$0xff]
    %vm30 = vcmask 326656
    %v31 = vsel %vm30, %v28, 0.0
    %32 = vadd.xlane.f32.xlu0 %v31
    %v33 = vpop.xlane.xlu0 %32
    %v34 = vsel %vm30, %v29, 0.0
    %35 = vadd.xlane.f32.xlu0 %v34
    %v36 = vpop.xlane.xlu0 %35
    %v37 = vrcp.pop 40.0
    %v38 = vmul.f32 %v33, %v37
    %v39 = vmul.f32 %v36, %v37
    %v40 = vsub.f32 %v28, %v38
    %v41 = vsub.f32 %v29, %v39
    %v42 = vmul.f32 %v40, %v40
    %v43 = vmul.f32 %v41, %v41
    %v44 = vsel %vm30, %v42, 0.0
    %45 = vadd.xlane.f32.xlu0 %v44
    %v46 = vpop.xlane.xlu0 %45
    %v47 = vsel %vm30, %v43, 0.0
    %48 = vadd.xlane.f32.xlu0 %v47
    %v49 = vpop.xlane.xlu0 %48
    %v50 = vmul.f32 %v46, %v37
    %v51 = vmul.f32 %v49, %v37
    %v52 = vadd.f32 %v50, 1e-05
    %v53 = vadd.f32 %v51, 1e-05
    %v54 = vrsqrt.pop %v52
    %v55 = vrsqrt.pop %v53
    %v56 = vmul.f32 %v40, %v54
    %v57 = vmul.f32 %v41, %v55
    %v58 = vld [vmem:[%s1] sm:$0x1]
    %v60 = vlaneseq
    %v61 = vshrl.u32 %v60, 7
    %v62 = vsub.s32 0, %v61
    %v63 = vrot.slane %v58, %v62
    %v65 = vmul.f32 %v56, %v63
    %v66 = vmul.f32 %v57, %v63
    %v67 = vld [vmem:[%s2] sm:$0x1]
    %v69 = vlaneseq
    %v70 = vshrl.u32 %v69, 7
    %v71 = vsub.s32 0, %v70
    %v72 = vrot.slane %v67, %v71
    %v74 = vadd.f32 %v65, %v72
    %v75 = vadd.f32 %v66, %v72
    %v76 = vpack.c.bf16 %v75, %v74
    %v77 = vld [vmem:[%s3] sm:$0xff]
    %v78 = vld [vmem:[%s3 + $0x8] sm:$0xff]
    %v79 = vld [vmem:[%s3 + $0x10] sm:$0xff]
    %v80 = vld [vmem:[%s3 + $0x18] sm:$0xff]
    %v81 = vld [vmem:[%s3 + $0x20] sm:$0xff]
    %v82 = vld [vmem:[%s4] sm:$0x3]
    %v84 = vlaneseq
    %v85 = vshrl.u32 %v84, 7
    %v86 = vsub.s32 0, %v85
    %v87 = vrot.slane %v82, %v86
    %v88 = vlaneseq
    %v89 = vshrl.u32 %v88, 7
    %v90 = vsub.s32 1, %v89
    %v91 = vrot.slane %v82, %v90
    %v99 = vunpack.c.l.b16 %v77
    %v100 = vunpack.c.h.b16 %v77
    %v101 = vunpack.c.l.b16 %v78
    %v102 = vunpack.c.h.b16 %v78
    %v103 = vunpack.c.l.b16 %v79
    %v104 = vunpack.c.h.b16 %v79
    %v105 = vunpack.c.l.b16 %v80
    %v106 = vunpack.c.h.b16 %v80
    %v107 = vunpack.c.l.b16 %v81
    %v108 = vunpack.c.h.b16 %v81
    %v109 = vpack.c.b16 %v101, %v99
    %v110 = vpack.c.b16 %v102, %v100
    %v111 = vpack.c.b16 %v105, %v103
    %v112 = vpack.c.b16 %v106, %v104
    %v113 = vpack.c.b16 %v107, %v107
    %v114 = vpack.c.b16 %v108, %v108
    %v120 = vsel %vm30, %v76, 0
    %vm122 = vcmask 1043456
    %v124 = vsel %vm122, %v113, 0
    %v127 = vsel %vm122, %v114, 0
    %129 = vmatprep.subr.bf16.mxu0 0
    %130 = vmatpush1.bf16.msra.mxu0 0
    %131 = vmatprep.subr.bf16.mxu0 0
    %132 = vmatpush1.bf16.msra.mxu0 0
    %133 = vmatprep.subr.bf16.mxu0 0
    %134 = vmatpush1.bf16.msra.mxu0 0
    %135 = vmatprep.subr.bf16.mxu0 0
    %136 = vmatpush1.bf16.msra.mxu0 0
    %137 = vmatprep.subr.bf16.mxu0 0
    %138 = vmatpush1.bf16.msra.mxu0 0
    %139 = vmatprep.subr.bf16.mxu0 %v127
    %140 = vmatpush1.bf16.msra.mxu0 %v124
    %141 = vmatprep.subr.bf16.mxu0 %v112
    %142 = vmatpush1.bf16.msra.mxu0 %v111
    %143 = vmatprep.subr.bf16.mxu0 %v110
    %144 = vmatpush1.bf16.msra.mxu0 %v109
    %145 = vmatprep.subr.bf16.mxu0 0
    %146 = vmatpush2.bf16.msra.mxu0 0
    %147 = vmatprep.subr.bf16.mxu0 0
    %148 = vmatpush2.bf16.msra.mxu0 0
    %149 = vmatprep.subr.bf16.mxu0 0
    %150 = vmatpush2.bf16.msra.mxu0 0
    %151 = vmatprep.subr.bf16.mxu0 0
    %152 = vmatpush2.bf16.msra.mxu0 0
    %153 = vmatprep.subr.bf16.mxu0 0
    %154 = vmatpush2.bf16.msra.mxu0 0
    %155 = vmatprep.subr.bf16.mxu0 0
    %156 = vmatpush2.bf16.msra.mxu0 0
    %157 = vmatprep.subr.bf16.mxu0 0
    %158 = vmatpush2.bf16.msra.mxu0 0
    %159 = vmatprep.subr.bf16.mxu0 0
    %160 = vmatpush2.bf16.msra.mxu0 0
    %161 = vmatprep.mubr.bf16.mxu0 0
    %162 = vmatmul.mubr.bf16.gmra.mxu0 %v120
    %v163 = vpop.f32.mrf.mxu0
    %v164 = vadd.f32 %v87, %v163
    %v165 = vpop.f32.mrf.mxu0
    %v166 = vadd.f32 %v91, %v165
    %v167 = vpop.f32.mrf.mxu0
    %v168 = vadd.f32 %v87, %v167
    %v169 = vpop.f32.mrf.mxu0
    %v170 = vadd.f32 %v91, %v169
    %171 = vdwg.mxu0
    %v172 = vmul.f32 %v164, 0.5
    %v173 = vmul.f32 %v166, 0.5
    %v174 = vmul.f32 %v168, 0.5
    %v175 = vmul.f32 %v170, 0.5
    %v176 = vmul.f32 %v164, 0.70710677
    %v177 = vmul.f32 %v166, 0.70710677
    %v178 = vmul.f32 %v168, 0.70710677
    %v179 = vmul.f32 %v170, 0.70710677
    %v180 = verf.f32.pop %v176
    %v181 = verf.f32.pop %v177
    %v182 = verf.f32.pop %v178
    %v183 = verf.f32.pop %v179
    %v184 = vadd.f32 %v180, 1.0
    %v185 = vadd.f32 %v181, 1.0
    %v186 = vadd.f32 %v182, 1.0
    %v187 = vadd.f32 %v183, 1.0
    %v188 = vmul.f32 %v172, %v184
    %v189 = vmul.f32 %v173, %v185
    %v190 = vmul.f32 %v174, %v186
    %v191 = vmul.f32 %v175, %v187
    %v192 = vpack.c.bf16 %v190, %v188
    %v193 = vpack.c.bf16 %v191, %v189
    %v194 = vld [vmem:[%s5] sm:$0xf]
    %v195 = vld [vmem:[%s5 + $0x4] sm:$0xf]
    %v196 = vld [vmem:[%s5 + $0x8] sm:$0xf]
    %v197 = vld [vmem:[%s5 + $0xc] sm:$0xf]
    %v198 = vld [vmem:[%s5 + $0x10] sm:$0xf]
    %v199 = vld [vmem:[%s5 + $0x14] sm:$0xf]
    %v200 = vld [vmem:[%s5 + $0x18] sm:$0xf]
    %v201 = vld [vmem:[%s5 + $0x1c] sm:$0xf]
    %v202 = vld [vmem:[%s5 + $0x20] sm:$0xf]
    %v203 = vld [vmem:[%s5 + $0x24] sm:$0xf]
    %v204 = vld [vmem:[%s5 + $0x28] sm:$0xf]
    %v205 = vld [vmem:[%s5 + $0x2c] sm:$0xf]
    %v206 = vld [vmem:[%s5 + $0x30] sm:$0xf]
    %v207 = vld [vmem:[%s5 + $0x34] sm:$0xf]
    %v208 = vld [vmem:[%s5 + $0x38] sm:$0xf]
    %v209 = vld [vmem:[%s5 + $0x3c] sm:$0xf]
    %v210 = vld [vmem:[%s5 + $0x40] sm:$0xf]
    %v211 = vld [vmem:[%s5 + $0x44] sm:$0xf]
    %v212 = vld [vmem:[%s5 + $0x48] sm:$0xf]
    %v213 = vld [vmem:[%s5 + $0x4c] sm:$0xf]
    %v214 = vld [vmem:[%s5 + $0x50] sm:$0xf]
    %v215 = vld [vmem:[%s5 + $0x54] sm:$0xf]
    %v216 = vld [vmem:[%s5 + $0x58] sm:$0xf]
    %v217 = vld [vmem:[%s5 + $0x5c] sm:$0xf]
    %v218 = vld [vmem:[%s5 + $0x60] sm:$0xf]
    %v219 = vld [vmem:[%s5 + $0x64] sm:$0xf]
    %v220 = vld [vmem:[%s5 + $0x68] sm:$0xf]
    %v221 = vld [vmem:[%s5 + $0x6c] sm:$0xf]
    %v222 = vld [vmem:[%s5 + $0x70] sm:$0xf]
    %v223 = vld [vmem:[%s5 + $0x74] sm:$0xf]
    %v224 = vld [vmem:[%s5 + $0x78] sm:$0xf]
    %v225 = vld [vmem:[%s5 + $0x7c] sm:$0xf]
    %v226 = vld [vmem:[%s6] sm:$0x1]
    %v228 = vlaneseq
    %v229 = vshrl.u32 %v228, 7
    %v230 = vsub.s32 0, %v229
    %v231 = vrot.slane %v226, %v230
    %v265 = vunpack.c.l.b16 %v194
    %v266 = vunpack.c.l.b16 %v195
    %v267 = vunpack.c.l.b16 %v196
    %v268 = vunpack.c.l.b16 %v197
    %v269 = vunpack.c.l.b16 %v198
    %v270 = vunpack.c.l.b16 %v199
    %v271 = vunpack.c.l.b16 %v200
    %v272 = vunpack.c.l.b16 %v201
    %v273 = vunpack.c.l.b16 %v202
    %v274 = vunpack.c.l.b16 %v203
    %v275 = vunpack.c.l.b16 %v204
    %v276 = vunpack.c.l.b16 %v205
    %v277 = vunpack.c.l.b16 %v206
    %v278 = vunpack.c.l.b16 %v207
    %v279 = vunpack.c.l.b16 %v208
    %v280 = vunpack.c.l.b16 %v209
    %v281 = vunpack.c.l.b16 %v210
    %v282 = vunpack.c.l.b16 %v211
    %v283 = vunpack.c.l.b16 %v212
    %v284 = vunpack.c.l.b16 %v213
    %v285 = vunpack.c.l.b16 %v214
    %v286 = vunpack.c.l.b16 %v215
    %v287 = vunpack.c.l.b16 %v216
    %v288 = vunpack.c.l.b16 %v217
    %v289 = vunpack.c.l.b16 %v218
    %v290 = vunpack.c.l.b16 %v219
    %v291 = vunpack.c.l.b16 %v220
    %v292 = vunpack.c.l.b16 %v221
    %v293 = vunpack.c.l.b16 %v222
    %v294 = vunpack.c.l.b16 %v223
    %v295 = vunpack.c.l.b16 %v224
    %v296 = vunpack.c.l.b16 %v225
    %v297 = vpack.c.b16 %v266, %v265
    %v298 = vpack.c.b16 %v268, %v267
    %v299 = vpack.c.b16 %v270, %v269
    %v300 = vpack.c.b16 %v272, %v271
    %v301 = vpack.c.b16 %v274, %v273
    %v302 = vpack.c.b16 %v276, %v275
    %v303 = vpack.c.b16 %v278, %v277
    %v304 = vpack.c.b16 %v280, %v279
    %v305 = vpack.c.b16 %v282, %v281
    %v306 = vpack.c.b16 %v284, %v283
    %v307 = vpack.c.b16 %v286, %v285
    %v308 = vpack.c.b16 %v288, %v287
    %v309 = vpack.c.b16 %v290, %v289
    %v310 = vpack.c.b16 %v292, %v291
    %v311 = vpack.c.b16 %v294, %v293
    %v312 = vpack.c.b16 %v296, %v295
    %329 = vmatprep.subr.bf16.mxu0 0
    %330 = vmatpush1.bf16.msra.mxu0 %v304
    %331 = vmatprep.subr.bf16.mxu0 0
    %332 = vmatpush1.bf16.msra.mxu0 %v303
    %333 = vmatprep.subr.bf16.mxu0 0
    %334 = vmatpush1.bf16.msra.mxu0 %v302
    %335 = vmatprep.subr.bf16.mxu0 0
    %336 = vmatpush1.bf16.msra.mxu0 %v301
    %337 = vmatprep.subr.bf16.mxu0 0
    %338 = vmatpush1.bf16.msra.mxu0 %v300
    %339 = vmatprep.subr.bf16.mxu0 0
    %340 = vmatpush1.bf16.msra.mxu0 %v299
    %341 = vmatprep.subr.bf16.mxu0 0
    %342 = vmatpush1.bf16.msra.mxu0 %v298
    %343 = vmatprep.subr.bf16.mxu0 0
    %344 = vmatpush1.bf16.msra.mxu0 %v297
    %345 = vmatprep.subr.bf16.mxu0 0
    %346 = vmatpush2.bf16.msra.mxu0 %v312
    %347 = vmatprep.subr.bf16.mxu0 0
    %348 = vmatpush2.bf16.msra.mxu0 %v311
    %349 = vmatprep.subr.bf16.mxu0 0
    %350 = vmatpush2.bf16.msra.mxu0 %v310
    %351 = vmatprep.subr.bf16.mxu0 0
    %352 = vmatpush2.bf16.msra.mxu0 %v309
    %353 = vmatprep.subr.bf16.mxu0 0
    %354 = vmatpush2.bf16.msra.mxu0 %v308
    %355 = vmatprep.subr.bf16.mxu0 0
    %356 = vmatpush2.bf16.msra.mxu0 %v307
    %357 = vmatprep.subr.bf16.mxu0 0
    %358 = vmatpush2.bf16.msra.mxu0 %v306
    %359 = vmatprep.subr.bf16.mxu0 0
    %360 = vmatpush2.bf16.msra.mxu0 %v305
    %361 = vmatprep.mubr.bf16.mxu0 %v193
    %362 = vmatmul.mubr.bf16.gmra.mxu0 %v192
    %v363 = vpop.f32.mrf.mxu0
    %v364 = vadd.f32 %v231, %v363
    %v365 = vpop.f32.mrf.mxu0
    %v366 = vpop.f32.mrf.mxu0
    %v367 = vadd.f32 %v231, %v366
    %v368 = vpop.f32.mrf.mxu0
    %369 = vdwg.mxu0
    %v370 = vadd.f32 %v364, %v28
    %v371 = vadd.f32 %v367, %v29
    %372 = vst.msk [vmem:[#allocation2] sm:$0xff] %vm30, %v370
    %373 = vst.msk [vmem:[#allocation2 + $0x8] sm:$0xff] %vm30, %v371
    // Predicated region
    $region30: #{residual_add_ff.1} parent=1 // pred_check
      _
    $region31: #{residual_add_ff.1} parent=1 // pred_check_branch
      %375 = sbr.rel (0) target = $region33
    $region32: #{residual_add_ff.1} parent=1 // pred_region
      %s377 = ssub.s32 256, 256
      %378 = vsyncadd [#allocation3], %s377
      %s379 = sshll.u32 [#allocation2], 4
      %s380 = int_to_ptr.vmem [resolvable:$true] %s379
      %385 = dma.vmem_to_hbm [thread:$0]  %s380, 256, %s7, [#allocation3], 128, 128, 8
    $region33: #{residual_add_ff.1} parent=1 // pred_fallthru
      _
    // Predicated region
    $region34: #{residual_add_ff.1} parent=1 // pred_check
      _
    $region35: #{residual_add_ff.1} parent=1 // pred_check_branch
      %387 = sbr.rel (0) target = $region37
    $region36: #{residual_add_ff.1} parent=1 // pred_region
      %388 = dma.done [#allocation3], 256
    $region37: #{residual_add_ff.1} parent=1 // pred_fallthru
      _
    %389 = vsyncpa [#allocation3], 1

</llo_original>
